<compile_context>
chip_gen: v7x
topology: tpu7x:2x2x1
jax: 0.10.0
libtpu: 0.0.40
codegen_flags: <defaults>
</compile_context>

<pallas_src>
import functools

import jax
import jax.numpy as jnp
from jax.experimental import pallas as pl
from jax.experimental.pallas import tpu as pltpu


def _round_up(v, m):
    return (v + m - 1) // m * m


def _predictor_kernel(x_ref, w_ref, b_ref, scores_ref, bbox_ref, *,
                      num_classes, compute_dtype):
    # x_ref     : (tile_n, C)   input dtype (f32) — cast in-register, no HBM pre-pass
    # w_ref     : (C, out_dim)  bf16, resident (constant index, single buffer)
    # b_ref     : (1, out_dim)  f32
    # scores_ref: (tile_n, num_classes)      bbox_ref: (tile_n, num_classes*4)
    x = x_ref[...].astype(compute_dtype)
    acc = jnp.dot(x, w_ref[...], preferred_element_type=jnp.float32)
    acc = acc + b_ref[...]
    scores_ref[...] = acc[:, :num_classes].astype(scores_ref.dtype)
    bbox_ref[...] = acc[:, num_classes:].astype(bbox_ref.dtype)


def fuse_predictor_params(w_cls, b_cls, w_bbox, b_bbox,
                          compute_dtype=jnp.bfloat16):
    """One-time (init-time) fusion of the two linear heads.

    Returns (w_fused (C, num_classes*5) in compute_dtype,
             b_fused (1, num_classes*5) in f32).
    """
    w = jnp.concatenate([w_cls, w_bbox], axis=1).astype(compute_dtype)
    b = jnp.concatenate([b_cls, b_bbox], axis=0).astype(jnp.float32)
    return w, b.reshape(1, -1)


def fast_rcnn_predictor(x, w_fused, b_fused, num_classes, *,
                        tile_n=256, out_dtype=None,
                        compute_dtype=jnp.bfloat16):
    """Forward pass of FastRCNNPredictor (both heads in one MXU pass).

    x       : (N, C) or (N, C, 1, 1)
    w_fused : (C, num_classes*5)  pre-fused weights (see fuse_predictor_params)
    b_fused : (1, num_classes*5)  pre-fused bias (f32)
    returns (scores (N, num_classes), bbox_deltas (N, num_classes*4))
    """
    if x.ndim == 4:
        assert x.shape[2] == 1 and x.shape[3] == 1, \
            "4-D input to FastRCNNPredictor must have spatial size 1x1"
    x = x.reshape(x.shape[0], -1)          # flatten(start_dim=1)

    n, c = x.shape
    out_dim = w_fused.shape[1]
    num_bbox = out_dim - num_classes
    assert w_fused.shape[0] == c and b_fused.shape == (1, out_dim)
    if out_dtype is None:
        out_dtype = x.dtype

    # Tile only N.  If N fits in one tile, use the full dim (always legal);
    # otherwise a multiple of 128 with Pallas clipping the partial last block.
    tile_n = max(128, _round_up(tile_n, 128))
    tile_n = n if n <= tile_n else tile_n
    grid = (pl.cdiv(n, tile_n),)

    x_bytes = x.dtype.itemsize
    w_bytes = w_fused.dtype.itemsize
    out_bytes = jnp.dtype(out_dtype).itemsize

    # VMEM budget: double-buffered x & output tiles, single-buffered weights,
    # plus in-kernel bf16 x cast and f32 accumulator.  Generous 2x headroom.
    vmem_est = (2 * tile_n * c * x_bytes
                + c * out_dim * w_bytes + out_dim * 4
                + 2 * tile_n * out_dim * out_bytes
                + tile_n * c * 2
                + tile_n * out_dim * 4)
    vmem_limit = int(min(64 << 20, max(2 * vmem_est + (4 << 20), 16 << 20)))
    # TODO(synk): for very large C (~>16K, non-FPN heads) add a K grid axis
    # ("arbitrary", last) with an f32 VMEM accumulator instead of loading the
    # full (tile_n, C) / (C, out_dim) blocks at once.

    cost = pl.CostEstimate(
        flops=2 * n * c * out_dim,
        transcendentals=0,
        bytes_accessed=(n * c * x_bytes
                        + c * out_dim * w_bytes
                        + n * out_dim * out_bytes),
    )

    kernel = functools.partial(_predictor_kernel, num_classes=num_classes,
                               compute_dtype=compute_dtype)

    scores, bbox_deltas = pl.pallas_call(
        kernel,
        out_shape=(jax.ShapeDtypeStruct((n, num_classes), out_dtype),
                   jax.ShapeDtypeStruct((n, num_bbox), out_dtype)),
        grid_spec=pltpu.PrefetchScalarGridSpec(
            num_scalar_prefetch=0,
            grid=grid,
            in_specs=[
                # activation tile marches down N (double-buffered by default)
                pl.BlockSpec((tile_n, c), lambda i: (i, 0)),
                # fused weight / bias: constant index -> resident, one buffer
                pl.BlockSpec((c, out_dim), lambda i: (0, 0),
                             pipeline_mode=pl.Buffered(1)),
                pl.BlockSpec((1, out_dim), lambda i: (0, 0),
                             pipeline_mode=pl.Buffered(1)),
            ],
            out_specs=(
                pl.BlockSpec((tile_n, num_classes), lambda i: (i, 0)),
                pl.BlockSpec((tile_n, num_bbox), lambda i: (i, 0)),
            ),
        ),
        compiler_params=pltpu.CompilerParams(
            dimension_semantics=("parallel",),
            vmem_limit_bytes=vmem_limit,
        ),
        cost_estimate=cost,
    )(x, w_fused, b_fused)

    return scores, bbox_deltas


def init_params(key, in_channels, num_classes, dtype=jnp.float32):
    """Deterministic init mimicking nn.Linear default (uniform +-1/sqrt(fan_in))."""
    k1, k2, k3, k4 = jax.random.split(key, 4)
    bound = 1.0 / (in_channels ** 0.5)
    w_cls = jax.random.uniform(k1, (in_channels, num_classes),
                               minval=-bound, maxval=bound, dtype=dtype)
    b_cls = jax.random.uniform(k2, (num_classes,),
                               minval=-bound, maxval=bound, dtype=dtype)
    w_bbox = jax.random.uniform(k3, (in_channels, num_classes * 4),
                                minval=-bound, maxval=bound, dtype=dtype)
    b_bbox = jax.random.uniform(k4, (num_classes * 4,),
                                minval=-bound, maxval=bound, dtype=dtype)
    return w_cls, b_cls, w_bbox, b_bbox


def _reference(x, w_cls, b_cls, w_bbox, b_bbox):
    xf = x.reshape(x.shape[0], -1)
    return xf @ w_cls + b_cls, xf @ w_bbox + b_bbox


if __name__ == "__main__":
    key = jax.random.PRNGKey(0)
    kx, kp, kx2, kp2 = jax.random.split(key, 4)

    # --- small module-consistent case: 8 RoIs, 32 channels, 1x1 spatial ----
    n_rois, in_channels, num_classes = 8, 32, 5
    x = jax.random.normal(kx, (n_rois, in_channels, 1, 1), dtype=jnp.float32)
    w_cls, b_cls, w_bbox, b_bbox = init_params(kp, in_channels, num_classes)
    w_f, b_f = fuse_predictor_params(w_cls, b_cls, w_bbox, b_bbox)  # init-time

    scores, bbox_deltas = fast_rcnn_predictor(x, w_f, b_f, num_classes)
    jax.block_until_ready((scores, bbox_deltas))

    ref_scores, ref_bbox = _reference(x, w_cls, b_cls, w_bbox, b_bbox)
    assert scores.shape == (n_rois, num_classes)
    assert bbox_deltas.shape == (n_rois, num_classes * 4)
    # bf16 MXU inputs with f32 accumulation -> loosened tolerance vs pure f32.
    assert jnp.allclose(scores, ref_scores, atol=2e-2, rtol=2e-2)
    assert jnp.allclose(bbox_deltas, ref_bbox, atol=2e-2, rtol=2e-2)

    # --- multi-tile case with an N remainder (grid + partial last block) ---
    n2, c2, nc2 = 300, 256, 21
    x2 = jax.random.normal(kx2, (n2, c2), dtype=jnp.float32)
    p2 = init_params(kp2, c2, nc2)
    w_f2, b_f2 = fuse_predictor_params(*p2)
    scores2, bbox2 = fast_rcnn_predictor(x2, w_f2, b_f2, nc2, tile_n=128)
    jax.block_until_ready((scores2, bbox2))

    ref_scores2, ref_bbox2 = _reference(x2, *p2)
    assert scores2.shape == (n2, nc2)
    assert bbox2.shape == (n2, nc2 * 4)
    assert jnp.allclose(scores2, ref_scores2, atol=3e-2, rtol=3e-2)
    assert jnp.allclose(bbox2, ref_bbox2, atol=3e-2, rtol=3e-2)

    print("KERNEL_OK")
</pallas_src>

<mosaic_0001>
module attributes {stable_mosaic.version = 11 : i64} {
  func.func @_predictor_kernel(%arg0: i32, %arg1: memref<8x32xf32, #tpu.memory_space<vmem>>, %arg2: memref<32x25xbf16, #tpu.memory_space<vmem>>, %arg3: memref<1x25xf32, #tpu.memory_space<vmem>>, %arg4: memref<8x5xf32, #tpu.memory_space<vmem>>, %arg5: memref<8x20xf32, #tpu.memory_space<vmem>>) attributes {dimension_semantics = [#tpu.dimension_semantics<parallel>], iteration_bounds = array<i64: 1>, scalar_prefetch = 0 : i64, scratch_operands = 0 : i64, tpu.core_type = #tpu.core_type<tc>, window_params = [{transform_indices = @transform_0, window_bounds = array<i64: 8, 32>}, {pipeline_mode = #tpu.pipeline_mode<synchronous>, transform_indices = @transform_1, window_bounds = array<i64: 32, 25>}, {pipeline_mode = #tpu.pipeline_mode<synchronous>, transform_indices = @transform_2, window_bounds = array<i64: 1, 25>}, {transform_indices = @transform_3, window_bounds = array<i64: 8, 5>}, {transform_indices = @transform_4, window_bounds = array<i64: 8, 20>}]} {
    %c0 = arith.constant 0 : index
    %c0_0 = arith.constant 0 : index
    %0 = vector.load %arg1[%c0, %c0_0] : memref<8x32xf32, #tpu.memory_space<vmem>>, vector<8x32xf32>
    %1 = arith.truncf %0 : vector<8x32xf32> to vector<8x32xbf16>
    %c0_1 = arith.constant 0 : index
    %c0_2 = arith.constant 0 : index
    %2 = vector.load %arg2[%c0_1, %c0_2] : memref<32x25xbf16, #tpu.memory_space<vmem>>, vector<32x25xbf16>
    %cst = arith.constant dense<0.000000e+00> : vector<8x25xf32>
    %3 = tpu.matmul %1, %2, %cst {dimension_numbers = #tpu.dot_dimension_numbers<[1], [0], [0], [1], [0, 0, 1, 1], [], []>} : vector<8x32xbf16>, vector<32x25xbf16>, vector<8x25xf32> -> vector<8x25xf32>
    %c0_3 = arith.constant 0 : index
    %c0_4 = arith.constant 0 : index
    %4 = vector.load %arg3[%c0_3, %c0_4] : memref<1x25xf32, #tpu.memory_space<vmem>>, vector<1x25xf32>
    %5 = vector.broadcast %4 : vector<1x25xf32> to vector<8x25xf32>
    %6 = arith.addf %3, %5 : vector<8x25xf32>
    %7 = vector.extract_strided_slice %6 {offsets = [0, 0], sizes = [8, 5], strides = [1, 1]} : vector<8x25xf32> to vector<8x5xf32>
    %c0_5 = arith.constant 0 : index
    %c0_6 = arith.constant 0 : index
    %8 = vector.load %arg4[%c0_5, %c0_6] : memref<8x5xf32, #tpu.memory_space<vmem>>, vector<8x5xf32>
    tpu.vector_store %arg4[%c0_5, %c0_6], %7 {strides = array<i32>} : memref<8x5xf32, #tpu.memory_space<vmem>>, vector<8x5xf32>,
    %9 = vector.extract_strided_slice %6 {offsets = [0, 5], sizes = [8, 20], strides = [1, 1]} : vector<8x25xf32> to vector<8x20xf32>
    %c0_7 = arith.constant 0 : index
    %c0_8 = arith.constant 0 : index
    %10 = vector.load %arg5[%c0_7, %c0_8] : memref<8x20xf32, #tpu.memory_space<vmem>>, vector<8x20xf32>
    tpu.vector_store %arg5[%c0_7, %c0_8], %9 {strides = array<i32>} : memref<8x20xf32, #tpu.memory_space<vmem>>, vector<8x20xf32>,
    return
  }
  func.func @transform_0(%arg0: i32) -> (i32, i32) {
    %c0_i32 = arith.constant 0 : i32
    %c0_i32_0 = arith.constant 0 : i32
    return %arg0, %c0_i32 : i32, i32
  }
  func.func @transform_1(%arg0: i32) -> (i32, i32) {
    %c0_i32 = arith.constant 0 : i32
    %c0_i32_0 = arith.constant 0 : i32
    %c0_i32_1 = arith.constant 0 : i32
    return %c0_i32, %c0_i32_0 : i32, i32
  }
  func.func @transform_2(%arg0: i32) -> (i32, i32) {
    %c0_i32 = arith.constant 0 : i32
    %c0_i32_0 = arith.constant 0 : i32
    %c0_i32_1 = arith.constant 0 : i32
    return %c0_i32, %c0_i32_0 : i32, i32
  }
  func.func @transform_3(%arg0: i32) -> (i32, i32) {
    %c0_i32 = arith.constant 0 : i32
    %c0_i32_0 = arith.constant 0 : i32
    return %arg0, %c0_i32 : i32, i32
  }
  func.func @transform_4(%arg0: i32) -> (i32, i32) {
    %c0_i32 = arith.constant 0 : i32
    %c0_i32_0 = arith.constant 0 : i32
    return %arg0, %c0_i32 : i32, i32
  }
}

</mosaic_0001>

<llo_original>
// kernel: tpu_custom_call.1
$region0: #{tpu_custom_call.1}
  #allocation0 [shape = 'u32[]', space=smem, size = 0x4, offset = 0x4, fixed_abs, tag = 'smem constant byte address 0x4 - core index']
  #allocation1 [shape = 'u32[144,128]{1,0:T(1,128)}', space=vmem, size = 0x12000, scoped, tag = 'internal scratch']
  %s0 = inlined_call_operand.hbm [shape: f32[8,32], index: 0, kind: input, shape index: {}]
  %s1 = inlined_call_operand.hbm [shape: bf16[32,25], index: 1, kind: input, shape index: {}]
  %s2 = inlined_call_operand.vmem [shape: f32[1,25], index: 2, kind: input, shape index: {}]
  %s3 = inlined_call_operand.hbm [shape: f32[8,5], index: 3, kind: output, shape index: {0}]
  %s4 = inlined_call_operand.hbm [shape: f32[8,20], index: 4, kind: output, shape index: {1}]
  %5 = xla_tuple %s3, %s4
  %s6 = sld [smem:[#allocation0]]
  $region38: #{tpu_custom_call.1} parent=0
    _
  %s8 = ssub.s32 1, %s6
  %s9 = scalar_select 0, %s8, %s6
  $region1: #{tpu_custom_call.1} parent=0
    #allocation2 [shape = 'u8[4096]{0}', space=vmem, size = 0x1000, scoped, tag = 'input window, operand 0, single buffered']
    #allocation3 [shape = 's32[1]{0}', space=sflag, size = 0x4, scoped, tag = 'scoped memory for tpu_custom_call.1']
    #allocation4 [shape = 's32[1]{0}', space=sflag, size = 0x4, scoped, tag = 'scoped memory for tpu_custom_call.1']
    #allocation5 [shape = 'u8[8192]{0}', space=vmem, size = 0x2000, scoped, tag = 'input window, operand 1, single buffered']
    #allocation6 [shape = 's32[1]{0}', space=sflag, size = 0x4, scoped, tag = 'scoped memory for tpu_custom_call.1']
    #allocation7 [shape = 'u8[4096]{0}', space=vmem, size = 0x1000, scoped, tag = 'output window, operand 0, single buffered']
    #allocation8 [shape = 'u8[4096]{0}', space=vmem, size = 0x1000, scoped, tag = 'output window, operand 1, single buffered']
    #allocation9 [shape = 's32[1]{0}', space=sflag, size = 0x4, scoped, tag = 'scoped memory for tpu_custom_call.1']
    %10 = vsyncpa [#allocation3], 0
    %11 = vsyncpa [#allocation6], 0
    %12 = vsyncpa [#allocation4], 0
    %13 = vsyncpa [#allocation9], 0
    // Predicated region
    $region2: #{tpu_custom_call.1} parent=1 // pred_check
      _
    $region3: #{tpu_custom_call.1} parent=1 // pred_check_branch
      %15 = sbr.rel (0) target = $region5
    $region4: #{tpu_custom_call.1} parent=1 // pred_region
      %s17 = ssub.s32 128, 128
      %18 = vsyncadd [#allocation3], %s17
      %s20 = sshll.u32 [#allocation2], 4
      %s21 = int_to_ptr.vmem [resolvable:$true] %s20
      %23 = dma.hbm_to_vmem [thread:$0]  %s0, 128, %s21, [#allocation3]
    $region5: #{tpu_custom_call.1} parent=1 // pred_fallthru
      _
    // Predicated region
    $region6: #{tpu_custom_call.1} parent=1 // pred_check
      _
    $region7: #{tpu_custom_call.1} parent=1 // pred_check_branch
      %25 = sbr.rel (0) target = $region9
    $region8: #{tpu_custom_call.1} parent=1 // pred_region
      %s27 = ssub.s32 256, 256
      %28 = vsyncadd [#allocation6], %s27
      %s29 = sshll.u32 [#allocation5], 4
      %s30 = int_to_ptr.vmem [resolvable:$true] %s29
      %35 = dma.hbm_to_vmem [thread:$0]  %s1, 256, %s30, [#allocation6], 64, 64, 4
    $region9: #{tpu_custom_call.1} parent=1 // pred_fallthru
      _
    // Predicated region
    $region10: #{tpu_custom_call.1} parent=1 // pred_check
      _
    $region11: #{tpu_custom_call.1} parent=1 // pred_check_branch
      %37 = sbr.rel (0) target = $region13
    $region12: #{tpu_custom_call.1} parent=1 // pred_region
      _
    $region13: #{tpu_custom_call.1} parent=1 // pred_fallthru
      _
    // Predicated region
    $region14: #{tpu_custom_call.1} parent=1 // pred_check
      _
    $region15: #{tpu_custom_call.1} parent=1 // pred_check_branch
      %39 = sbr.rel (0) target = $region17
    $region16: #{tpu_custom_call.1} parent=1 // pred_region
      %40 = dma.done [#allocation3], 128
    $region17: #{tpu_custom_call.1} parent=1 // pred_fallthru
      _
    // Predicated region
    $region18: #{tpu_custom_call.1} parent=1 // pred_check
      _
    $region19: #{tpu_custom_call.1} parent=1 // pred_check_branch
      %42 = sbr.rel (0) target = $region21
    $region20: #{tpu_custom_call.1} parent=1 // pred_region
      %43 = dma.done [#allocation6], 256
    $region21: #{tpu_custom_call.1} parent=1 // pred_fallthru
      _
    %v45 = vld [vmem:[#allocation2] sm:$0xff]
    %v46 = vpack.c.bf16 %v45, %v45
    %v47 = vld [vmem:[#allocation5] sm:$0xf]
    %v48 = vld [vmem:[#allocation5 + $0x4] sm:$0xf]
    %v49 = vld [vmem:[#allocation5 + $0x8] sm:$0xf]
    %v50 = vld [vmem:[#allocation5 + $0xc] sm:$0xf]
    %v51 = vld [vmem:[%s2] sm:$0x1]
    %v53 = vlaneseq
    %v54 = vshrl.u32 %v53, 7
    %v55 = vsub.s32 0, %v54
    %v56 = vrot.slane %v51, %v55
    %v62 = vunpack.c.l.b16 %v47
    %v63 = vunpack.c.l.b16 %v48
    %v64 = vunpack.c.l.b16 %v49
    %v65 = vunpack.c.l.b16 %v50
    %v66 = vpack.c.b16 %v63, %v62
    %v67 = vpack.c.b16 %v65, %v64
    %vm70 = vcmask 261120
    %v72 = vsel %vm70, %v46, 0
    %74 = vmatprep.subr.bf16.mxu0 0
    %75 = vmatpush1.bf16.msra.mxu0 %v66
    %76 = vmatprep.subr.bf16.mxu0 0
    %77 = vmatpush1.bf16.msra.mxu0 %v67
    %78 = vmatprep.subr.bf16.mxu0 0
    %79 = vmatpush1.bf16.msra.mxu0 0
    %80 = vmatprep.subr.bf16.mxu0 0
    %81 = vmatpush1.bf16.msra.mxu0 0
    %82 = vmatprep.subr.bf16.mxu0 0
    %83 = vmatpush1.bf16.msra.mxu0 0
    %84 = vmatprep.subr.bf16.mxu0 0
    %85 = vmatpush1.bf16.msra.mxu0 0
    %86 = vmatprep.subr.bf16.mxu0 0
    %87 = vmatpush1.bf16.msra.mxu0 0
    %88 = vmatprep.subr.bf16.mxu0 0
    %89 = vmatpush1.bf16.msra.mxu0 0
    %90 = vmatprep.subr.bf16.mxu0 0
    %91 = vmatpush1.bf16.msra.mxu0 0
    %92 = vmatprep.subr.bf16.mxu0 0
    %93 = vmatpush1.bf16.msra.mxu0 0
    %94 = vmatprep.subr.bf16.mxu0 0
    %95 = vmatpush1.bf16.msra.mxu0 0
    %96 = vmatprep.subr.bf16.mxu0 0
    %97 = vmatpush1.bf16.msra.mxu0 0
    %98 = vmatprep.subr.bf16.mxu0 0
    %99 = vmatpush1.bf16.msra.mxu0 0
    %100 = vmatprep.subr.bf16.mxu0 0
    %101 = vmatpush1.bf16.msra.mxu0 0
    %102 = vmatprep.subr.bf16.mxu0 0
    %103 = vmatpush1.bf16.msra.mxu0 0
    %104 = vmatprep.subr.bf16.mxu0 0
    %105 = vmatpush1.bf16.msra.mxu0 0
    %106 = vmatprep.mubr.bf16.mxu0 0
    %107 = vmatmul.mubr.bf16.gmra.mrb[0].mxu0 %v72
    %v108 = vpop.f32.mrb[0].mxu0
    %v109 = vadd.f32 %v56, %v108
    %v110 = vpop.f32.mrb[0].mxu0
    %v111 = vpop.f32.mrb[0].mxu0
    %v112 = vpop.f32.mrb[0].mxu0
    %113 = vdwg.mxu0
    %vm114 = vcmask 39936
    %115 = vst.msk [vmem:[#allocation7] sm:$0xff] %vm114, %v109
    %117 = vrot.lane.b32.xlu0 %v109, 123
    %v118 = vpop.permute.xlu0 %117
    %vm120 = vcmask 162816
    %121 = vst.msk [vmem:[#allocation8] sm:$0xff] %vm120, %v118
    // Predicated region
    $region22: #{tpu_custom_call.1} parent=1 // pred_check
      _
    $region23: #{tpu_custom_call.1} parent=1 // pred_check_branch
      %123 = sbr.rel (0) target = $region25
    $region24: #{tpu_custom_call.1} parent=1 // pred_region
      %s125 = ssub.s32 128, 128
      %126 = vsyncadd [#allocation4], %s125
      %s128 = sshll.u32 [#allocation7], 4
      %s129 = int_to_ptr.vmem [resolvable:$true] %s128
      %131 = dma.vmem_to_hbm [thread:$0]  %s129, 128, %s3, [#allocation4]
    $region25: #{tpu_custom_call.1} parent=1 // pred_fallthru
      _
    // Predicated region
    $region26: #{tpu_custom_call.1} parent=1 // pred_check
      _
    $region27: #{tpu_custom_call.1} parent=1 // pred_check_branch
      %133 = sbr.rel (0) target = $region29
    $region28: #{tpu_custom_call.1} parent=1 // pred_region
      %s135 = ssub.s32 128, 128
      %136 = vsyncadd [#allocation9], %s135
      %s138 = sshll.u32 [#allocation8], 4
      %s139 = int_to_ptr.vmem [resolvable:$true] %s138
      %141 = dma.vmem_to_hbm [thread:$0]  %s139, 128, %s4, [#allocation9]
    $region29: #{tpu_custom_call.1} parent=1 // pred_fallthru
      _
    // Predicated region
    $region30: #{tpu_custom_call.1} parent=1 // pred_check
      _
    $region31: #{tpu_custom_call.1} parent=1 // pred_check_branch
      %143 = sbr.rel (0) target = $region33
    $region32: #{tpu_custom_call.1} parent=1 // pred_region
      %144 = dma.done [#allocation4], 128
    $region33: #{tpu_custom_call.1} parent=1 // pred_fallthru
      _
    // Predicated region
    $region34: #{tpu_custom_call.1} parent=1 // pred_check
      _
    $region35: #{tpu_custom_call.1} parent=1 // pred_check_branch
      %146 = sbr.rel (0) target = $region37
    $region36: #{tpu_custom_call.1} parent=1 // pred_region
      %147 = dma.done [#allocation9], 128
    $region37: #{tpu_custom_call.1} parent=1 // pred_fallthru
      _
    %148 = vsyncpa [#allocation3], 1
    %149 = vsyncpa [#allocation6], 1
    %150 = vsyncpa [#allocation4], 1
    %151 = vsyncpa [#allocation9], 1

</llo_original>
